<compile_context>
chip_gen: v5e
topology: v5e:2x2
jax: 0.10.0
libtpu: 0.0.40
codegen_flags: <defaults>
</compile_context>

<pallas_src>
import functools

import jax
import jax.numpy as jnp
from jax.experimental import pallas as pl
from jax.experimental.pallas import tpu as pltpu

LANES = 128
SUBLANES = 8
ROW_TILE_MAX = 8192                    # 8192 x 128 f32 = 4 MiB per input block
NUM_CORES_FALLBACK = 2                 # v7x has 2 TensorCores; harmless on v5e/v6e
VMEM_LIMIT_BYTES = 48 * 1024 * 1024    # > scoped defaults, < v7x 64 MiB physical


@functools.lru_cache(maxsize=1)
def _num_tensorcores():
    """Best-effort TensorCore count for the local chip (falls back to 2)."""
    try:
        info = pltpu.get_tpu_info()
        for name in ("num_cores", "core_count", "num_tensorcores",
                     "tensorcore_count", "num_cores_per_chip", "cores_per_chip"):
            n = getattr(info, name, None)
            if n is not None:
                n = int(n)
                if 1 <= n <= 8:
                    return n
    except Exception:
        pass
    return NUM_CORES_FALLBACK


def _content_sse_kernel(g_ref, t_ref, partial_ref, *, rows, row_tile,
                        steps_per_core, need_mask):
    """Accumulate sum((g - t)^2) over this core's row tiles into an (8,128) slab."""
    c = pl.program_id(0)          # parallel (TensorCore) axis
    s = pl.program_id(1)          # arbitrary (reduction) axis, innermost

    @pl.when(s == 0)
    def _():
        partial_ref[...] = jnp.zeros_like(partial_ref)

    def diff():
        return g_ref[...].astype(jnp.float32) - t_ref[...].astype(jnp.float32)

    def accumulate(d):
        sq = d * d
        # Fold (row_tile, 128) -> (8, 128): leading-axis reduce is pure VPU
        # vreg-wise adds (no XLU in the steady state).
        partial_ref[...] += jnp.sum(
            sq.reshape(row_tile // SUBLANES, SUBLANES, LANES), axis=0)

    if not need_mask:
        accumulate(diff())
    else:
        # Only the (at most one per core) tile hanging past `rows` pays for the
        # iota/compare/select; every full tile takes the cheap path below.
        row_base = (c * steps_per_core + s) * row_tile
        is_partial = row_base + row_tile > rows

        @pl.when(jnp.logical_not(is_partial))
        def _():
            accumulate(diff())

        @pl.when(is_partial)
        def _():
            local_row = jax.lax.broadcasted_iota(jnp.int32, (row_tile, LANES), 0)
            keep = (row_base + local_row) < rows
            # Mask BEFORE accumulation: padded/clamped garbage (even NaN/Inf)
            # is replaced by 0.0 and contributes nothing.
            accumulate(jnp.where(keep, diff(), 0.0))


def content_layer_forward(generated_activations, target_activations):
    """Returns (generated_activations, mse_loss), mirroring ContentLayer.forward:
    the input passes through unchanged and the MSE loss is produced as a scalar."""
    assert generated_activations.shape == target_activations.shape
    n_elem = generated_activations.size

    g_flat = generated_activations.reshape(-1)
    t_flat = target_activations.reshape(-1)

    aligned = (n_elem // LANES) * LANES
    rows = aligned // LANES

    if rows < SUBLANES:
        # Degenerate tiny input: not worth a kernel launch.
        d = g_flat.astype(jnp.float32) - t_flat.astype(jnp.float32)
        return generated_activations, jnp.sum(d * d) / jnp.float32(n_elem)

    # Ragged (<128-element) tail: summed with a trivial XLA reduce instead of
    # jnp.pad-ing (and thus copying) the full inputs.
    if aligned != n_elem:
        dt = (g_flat[aligned:].astype(jnp.float32)
              - t_flat[aligned:].astype(jnp.float32))
        tail_sse = jnp.sum(dt * dt)
        g_main, t_main = g_flat[:aligned], t_flat[:aligned]
    else:
        tail_sse = jnp.float32(0.0)
        g_main, t_main = g_flat, t_flat

    g2 = g_main.reshape(rows, LANES)
    t2 = t_main.reshape(rows, LANES)

    # Largest allowed row tile (amortises per-step overhead); multiple of 8.
    row_tile = (min(ROW_TILE_MAX, rows) // SUBLANES) * SUBLANES
    tiles_total = pl.cdiv(rows, row_tile)

    # Ceil-split the row tiles across TensorCores.  Overhanging tiles are
    # clamped in the index map (DMA stays in range) and masked to zero.
    num_cores = max(1, min(_num_tensorcores(), tiles_total))
    steps_per_core = pl.cdiv(tiles_total, num_cores)
    need_mask = (num_cores * steps_per_core * row_tile) != rows
    last_tile = tiles_total - 1

    def in_index(c, s):
        t = c * steps_per_core + s
        return (jnp.minimum(t, last_tile), 0)   # clamp keeps the DMA in range

    kernel = functools.partial(
        _content_sse_kernel, rows=rows, row_tile=row_tile,
        steps_per_core=steps_per_core, need_mask=need_mask)

    partials = pl.pallas_call(
        kernel,
        out_shape=jax.ShapeDtypeStruct((num_cores * SUBLANES, LANES), jnp.float32),
        grid_spec=pltpu.PrefetchScalarGridSpec(
            num_scalar_prefetch=0,
            grid=(num_cores, steps_per_core),
            # TODO(synk): if xprof shows exposed DMA on v7x, sweep
            # pipeline_mode=pl.Buffered(3) on these two input specs.
            in_specs=[
                pl.BlockSpec((row_tile, LANES), in_index),
                pl.BlockSpec((row_tile, LANES), in_index),
            ],
            out_specs=pl.BlockSpec((SUBLANES, LANES), lambda c, s: (c, 0)),
        ),
        compiler_params=pltpu.CompilerParams(
            # "parallel" shards the core axis where the compiler supports it;
            # CORE_PARALLEL requires the axis to equal the physical core count,
            # so we keep the portable semantics here.
            dimension_semantics=("parallel", "arbitrary"),
            vmem_limit_bytes=VMEM_LIMIT_BYTES),
    )(g2, t2)

    loss = (jnp.sum(partials) + tail_sse) / jnp.float32(n_elem)
    # Identity pass-through: the module returns its input unmodified, so no
    # copy / HBM writeback is performed at all.
    return generated_activations, loss


def _check(shape, key):
    k_tgt, k_gen = jax.random.split(key)
    target = jax.random.normal(k_tgt, shape, dtype=jnp.float32)
    generated = jax.random.normal(k_gen, shape, dtype=jnp.float32)

    out, loss = content_layer_forward(generated, target)
    jax.block_until_ready((out, loss))

    ref_loss = jnp.mean((generated - target) ** 2)
    assert jnp.allclose(loss, ref_loss, rtol=1e-4, atol=1e-6), (shape, loss, ref_loss)
    assert jnp.array_equal(out, generated)


if __name__ == "__main__":
    keys = jax.random.split(jax.random.PRNGKey(0), 5)
    # Primary small case consistent with conv activations (B, C, H, W).
    _check((2, 4, 16, 16), keys[0])
    # Ragged numel (not a multiple of 128): kernel prefix + tiny XLA tail.
    _check((2, 3, 33, 35), keys[1])
    # Larger ragged shape: single-tile kernel + tail path.
    _check((3, 17, 61, 59), keys[2])
    # Two full 8192-row tiles: multi-step / cross-core accumulation, no mask.
    _check((16, 32, 64, 64), keys[3])
    # Three tiles with a ragged last one: odd-tile ceil-split, clamped index
    # map and the runtime-gated mask path.
    _check((5, 32, 120, 112), keys[4])
    print("KERNEL_OK")
</pallas_src>

<mosaic_0001>
module attributes {stable_mosaic.version = 11 : i64} {
  func.func @_content_sse_kernel(%arg0: i32, %arg1: i32, %arg2: memref<16x128xf32, #tpu.memory_space<vmem>>, %arg3: memref<16x128xf32, #tpu.memory_space<vmem>>, %arg4: memref<8x128xf32, #tpu.memory_space<vmem>>) attributes {dimension_semantics = [#tpu.dimension_semantics<parallel>, #tpu.dimension_semantics<arbitrary>], iteration_bounds = array<i64: 1, 1>, scalar_prefetch = 0 : i64, scratch_operands = 0 : i64, tpu.core_type = #tpu.core_type<tc>, window_params = [{transform_indices = @transform_0, window_bounds = array<i64: 16, 128>}, {transform_indices = @transform_1, window_bounds = array<i64: 16, 128>}, {transform_indices = @transform_2, window_bounds = array<i64: 8, 128>}]} {
    %c0_i32 = arith.constant 0 : i32
    %0 = arith.cmpi eq, %arg1, %c0_i32 : i32
    %1 = arith.extui %0 : i1 to i32
    %c0_i32_0 = arith.constant 0 : i32
    %2 = arith.cmpi ne, %1, %c0_i32_0 : i32
    scf.if %2 {
      %cst_8 = arith.constant 0.000000e+00 : f32
      %12 = vector.broadcast %cst_8 : f32 to vector<8x128xf32>
      %c0_9 = arith.constant 0 : index
      %c0_10 = arith.constant 0 : index
      %13 = vector.load %arg4[%c0_9, %c0_10] : memref<8x128xf32, #tpu.memory_space<vmem>>, vector<8x128xf32>
      tpu.vector_store %arg4[%c0_9, %c0_10], %12 {strides = array<i32>} : memref<8x128xf32, #tpu.memory_space<vmem>>, vector<8x128xf32>,
    } else {
    }
    %c0 = arith.constant 0 : index
    %c0_1 = arith.constant 0 : index
    %3 = vector.load %arg2[%c0, %c0_1] : memref<16x128xf32, #tpu.memory_space<vmem>>, vector<16x128xf32>
    %c0_2 = arith.constant 0 : index
    %c0_3 = arith.constant 0 : index
    %4 = vector.load %arg3[%c0_2, %c0_3] : memref<16x128xf32, #tpu.memory_space<vmem>>, vector<16x128xf32>
    %5 = arith.subf %3, %4 : vector<16x128xf32>
    %6 = arith.mulf %5, %5 : vector<16x128xf32>
    %c0_4 = arith.constant 0 : index
    %c0_5 = arith.constant 0 : index
    %7 = vector.load %arg4[%c0_4, %c0_5] : memref<8x128xf32, #tpu.memory_space<vmem>>, vector<8x128xf32>
    %8 = vector.shape_cast %6 : vector<16x128xf32> to vector<2x8x128xf32>
    %cst = arith.constant dense<0.000000e+00> : vector<8x128xf32>
    %9 = vector.multi_reduction <add>, %8, %cst [0] : vector<2x8x128xf32> to vector<8x128xf32>
    %10 = arith.addf %7, %9 : vector<8x128xf32>
    %c0_6 = arith.constant 0 : index
    %c0_7 = arith.constant 0 : index
    %11 = vector.load %arg4[%c0_6, %c0_7] : memref<8x128xf32, #tpu.memory_space<vmem>>, vector<8x128xf32>
    tpu.vector_store %arg4[%c0_6, %c0_7], %10 {strides = array<i32>} : memref<8x128xf32, #tpu.memory_space<vmem>>, vector<8x128xf32>,
    return
  }
  func.func @transform_0(%arg0: i32, %arg1: i32) -> (i32, i32) {
    %c1_i32 = arith.constant 1 : i32
    %0 = arith.muli %arg0, %c1_i32 : i32
    %1 = arith.addi %0, %arg1 : i32
    %c0_i32 = arith.constant 0 : i32
    %2 = arith.minsi %1, %c0_i32 : i32
    %c0_i32_0 = arith.constant 0 : i32
    %c0_i32_1 = arith.constant 0 : i32
    return %2, %c0_i32_0 : i32, i32
  }
  func.func @transform_1(%arg0: i32, %arg1: i32) -> (i32, i32) {
    %c1_i32 = arith.constant 1 : i32
    %0 = arith.muli %arg0, %c1_i32 : i32
    %1 = arith.addi %0, %arg1 : i32
    %c0_i32 = arith.constant 0 : i32
    %2 = arith.minsi %1, %c0_i32 : i32
    %c0_i32_0 = arith.constant 0 : i32
    %c0_i32_1 = arith.constant 0 : i32
    return %2, %c0_i32_0 : i32, i32
  }
  func.func @transform_2(%arg0: i32, %arg1: i32) -> (i32, i32) {
    %c0_i32 = arith.constant 0 : i32
    %c0_i32_0 = arith.constant 0 : i32
    return %arg0, %c0_i32 : i32, i32
  }
}

</mosaic_0001>

<llo_original>
// kernel: tpu_custom_call.1
$region0: #{tpu_custom_call.1}
  #allocation0 [shape = 'u32[]', space=smem, size = 0x4, offset = 0x4, fixed_abs, tag = 'smem constant byte address 0x4 - core index']
  #allocation1 [shape = 'u32[72,128]{1,0:T(1,128)}', space=vmem, size = 0x9000, scoped, tag = 'internal scratch']
  %s0 = inlined_call_operand.hbm [shape: f32[16,128], index: 0, kind: input, shape index: {}]
  %s1 = inlined_call_operand.hbm [shape: f32[16,128], index: 1, kind: input, shape index: {}]
  %s2 = inlined_call_operand.hbm [shape: f32[8,128], index: 2, kind: output, shape index: {}]
  %s3 = sld [smem:[#allocation0]]
  $region30: #{tpu_custom_call.1} parent=0
    _
  %s5 = ssub.s32 1, %s3
  %s6 = scalar_select 0, %s5, %s3
  $region1: #{tpu_custom_call.1} parent=0
    #allocation2 [shape = 'u8[8192]{0}', space=vmem, size = 0x2000, scoped, tag = 'input window, operand 0, single buffered']
    #allocation3 [shape = 's32[1]{0}', space=sflag, size = 0x4, scoped, tag = 'scoped memory for tpu_custom_call.1']
    #allocation4 [shape = 's32[1]{0}', space=sflag, size = 0x4, scoped, tag = 'scoped memory for tpu_custom_call.1']
    #allocation5 [shape = 'u8[8192]{0}', space=vmem, size = 0x2000, scoped, tag = 'input window, operand 1, single buffered']
    #allocation6 [shape = 's32[1]{0}', space=sflag, size = 0x4, scoped, tag = 'scoped memory for tpu_custom_call.1']
    #allocation7 [shape = 'u8[4096]{0}', space=vmem, size = 0x1000, scoped, tag = 'output window, operand 0, single buffered']
    %7 = vsyncpa [#allocation3], 0
    %8 = vsyncpa [#allocation6], 0
    %9 = vsyncpa [#allocation4], 0
    // Predicated region
    $region2: #{tpu_custom_call.1} parent=1 // pred_check
      _
    $region3: #{tpu_custom_call.1} parent=1 // pred_check_branch
      %11 = sbr.rel (0) target = $region5
    $region4: #{tpu_custom_call.1} parent=1 // pred_region
      %s12 = sadd.s32 0, 0
      %p13 = scmp.lt.s32.totalorder %s12, 0
      %s14 = scalar_select %p13, %s12, 0
      %s15 = smul.u32 2, %s14
      %17 = vsyncadd [#allocation3], 0
      %s18 = smul.addr %s15, 8
      %s19 = scalar_lea.hbm %s0, %s18
      %s20 = sshll.u32 %s19, 4
      %s21 = int_to_ptr.hbm [resolvable:$true] %s20
      %s22 = sshll.u32 [#allocation2], 4
      %s23 = int_to_ptr.vmem [resolvable:$true] %s22
      %28 = dma.hbm_to_vmem [thread:$0]  %s21, 256, %s23, [#allocation3], 128, 128, 8
    $region5: #{tpu_custom_call.1} parent=1 // pred_fallthru
      _
    // Predicated region
    $region6: #{tpu_custom_call.1} parent=1 // pred_check
      _
    $region7: #{tpu_custom_call.1} parent=1 // pred_check_branch
      %30 = sbr.rel (0) target = $region9
    $region8: #{tpu_custom_call.1} parent=1 // pred_region
      %s31 = sadd.s32 0, 0
      %p32 = scmp.lt.s32.totalorder %s31, 0
      %s33 = scalar_select %p32, %s31, 0
      %s34 = smul.u32 2, %s33
      %36 = vsyncadd [#allocation6], 0
      %s37 = smul.addr %s34, 8
      %s38 = scalar_lea.hbm %s1, %s37
      %s39 = sshll.u32 %s38, 4
      %s40 = int_to_ptr.hbm [resolvable:$true] %s39
      %s41 = sshll.u32 [#allocation5], 4
      %s42 = int_to_ptr.vmem [resolvable:$true] %s41
      %47 = dma.hbm_to_vmem [thread:$0]  %s40, 256, %s42, [#allocation6], 128, 128, 8
    $region9: #{tpu_custom_call.1} parent=1 // pred_fallthru
      _
    // Predicated region
    $region10: #{tpu_custom_call.1} parent=1 // pred_check
      _
    $region11: #{tpu_custom_call.1} parent=1 // pred_check_branch
      %49 = sbr.rel (0) target = $region13
    $region12: #{tpu_custom_call.1} parent=1 // pred_region
      %51 = dma.done [#allocation3], 256
    $region13: #{tpu_custom_call.1} parent=1 // pred_fallthru
      _
    // Predicated region
    $region14: #{tpu_custom_call.1} parent=1 // pred_check
      _
    $region15: #{tpu_custom_call.1} parent=1 // pred_check_branch
      %53 = sbr.rel (0) target = $region17
    $region16: #{tpu_custom_call.1} parent=1 // pred_region
      %55 = dma.done [#allocation6], 256
    $region17: #{tpu_custom_call.1} parent=1 // pred_fallthru
      _
    %s56 = sadd.s32 0, 0
    %p57 = scmp.lt.s32.totalorder %s56, 0
    %s58 = scalar_select %p57, %s56, 0
    %s59 = smul.u32 2, %s58
    %s60 = sadd.s32 0, 0
    %p61 = scmp.lt.s32.totalorder %s60, 0
    %s62 = scalar_select %p61, %s60, 0
    %s63 = smul.u32 2, %s62
    %p64 = scmp.eq.s32.totalorder 0, 0
    // Predicated region
    $region18: #{tpu_custom_call.1} parent=1 // pred_check
      %p65 = pneg %p64
    $region19: #{tpu_custom_call.1} parent=1 // pred_check_branch
      %67 = sbr.rel (%p65) target = $region21
    $region20: #{tpu_custom_call.1} parent=1 // pred_region
      %68 = vst [vmem:[#allocation7] sm:$0xff] 0.0
    $region21: #{tpu_custom_call.1} parent=1 // pred_fallthru
      _
    %v69 = vld [vmem:[#allocation2] sm:$0xff]
    %v70 = vld [vmem:[#allocation2 + $0x8] sm:$0xff]
    %v71 = vld [vmem:[#allocation5] sm:$0xff]
    %v72 = vld [vmem:[#allocation5 + $0x8] sm:$0xff]
    %v73 = vsub.f32 %v69, %v71
    %v74 = vsub.f32 %v70, %v72
    %v75 = vmul.f32 %v73, %v73
    %v76 = vmul.f32 %v74, %v74
    %v77 = vld [vmem:[#allocation7] sm:$0xff]
    %v78 = vadd.f32 %v75, %v76
    %v79 = vadd.f32 %v77, %v78
    %80 = vst [vmem:[#allocation7] sm:$0xff] %v79
    // Predicated region
    $region22: #{tpu_custom_call.1} parent=1 // pred_check
      _
    $region23: #{tpu_custom_call.1} parent=1 // pred_check_branch
      %82 = sbr.rel (0) target = $region25
    $region24: #{tpu_custom_call.1} parent=1 // pred_region
      %84 = vsyncadd [#allocation4], 0
      %s86 = sshll.u32 [#allocation7], 4
      %s87 = int_to_ptr.vmem [resolvable:$true] %s86
      %s88 = sshll.u32 %s2, 4
      %s89 = int_to_ptr.hbm [resolvable:$true] %s88
      %91 = dma.vmem_to_hbm [thread:$0]  %s87, 128, %s89, [#allocation4]
    $region25: #{tpu_custom_call.1} parent=1 // pred_fallthru
      _
    // Predicated region
    $region26: #{tpu_custom_call.1} parent=1 // pred_check
      _
    $region27: #{tpu_custom_call.1} parent=1 // pred_check_branch
      %93 = sbr.rel (0) target = $region29
    $region28: #{tpu_custom_call.1} parent=1 // pred_region
      %95 = dma.done [#allocation4], 128
    $region29: #{tpu_custom_call.1} parent=1 // pred_fallthru
      _
    %96 = vsyncpa [#allocation3], 1
    %97 = vsyncpa [#allocation6], 1
    %98 = vsyncpa [#allocation4], 1

</llo_original>
